<compile_context>
chip_gen: v7x
topology: tpu7x:2x2x1
jax: 0.10.0
libtpu: 0.0.40
codegen_flags: <defaults>
</compile_context>

<pallas_src>
import functools

import jax
import jax.numpy as jnp
from jax.experimental import pallas as pl
from jax.experimental.pallas import tpu as pltpu


def _sublane_multiple(dtype) -> int:
    # f32 -> 8, bf16/f16 -> 16, int8/fp8 -> 32 (sub-32-bit packs along sublanes)
    itemsize = jnp.dtype(dtype).itemsize
    return max(8, 32 // itemsize)


def _round_up(x: int, m: int) -> int:
    return (x + m - 1) // m * m


def _physical_vmem_bytes() -> int:
    try:
        return int(pltpu.get_tpu_info().vmem_capacity_bytes)
    except Exception:
        return 64 << 20  # conservative fallback: v7x per-TensorCore VMEM


def _rmsnorm_kernel(x_ref, w_ref, o_ref, *, eps, fast_math):
    # x_ref: (block_rows, dim) tile; w_ref: (1, dim); o_ref: (block_rows, dim)
    x32 = x_ref[...].astype(jnp.float32)                    # x.float()
    ms = jnp.mean(x32 * x32, axis=-1, keepdims=True)        # mean(x*x, -1)
    inv = jax.lax.rsqrt(ms + eps)                           # rsqrt(. + eps)
    w32 = w_ref[...].astype(jnp.float32)
    if fast_math:
        # Skip the f32 -> x.dtype -> f32 round-trip on `normed` (<=1 ulp delta).
        out = x32 * inv * w32
    else:
        normed = (x32 * inv).astype(x_ref.dtype)            # .type_as(x)
        out = w32 * normed.astype(jnp.float32)               # weight * normed
    o_ref[...] = out.astype(o_ref.dtype)


def rmsnorm(x, weight, eps=1e-6, *, out_dtype=None, block_rows=None,
            target_tile_bytes=4 << 20, min_grid_steps=8, fast_math=False):
    """RMSNorm over the last axis of x.

    Default (out_dtype=None, fast_math=False) matches the PyTorch module bit
    layout: weight * normed(x.dtype), output in promote_types(weight, x).
    Pass out_dtype=x.dtype (and optionally fast_math=True) for the
    bandwidth-optimal path on bf16 activations.
    """
    orig_shape = x.shape
    dim = orig_shape[-1]
    assert weight.shape == (dim,)

    x2d = x.reshape(-1, dim)
    rows = x2d.shape[0]

    if out_dtype is None:
        # Strict torch parity: weight(dtype) * normed(x.dtype) -> promoted dtype.
        out_dtype = jnp.promote_types(weight.dtype, x.dtype)
    out_dtype = jnp.dtype(out_dtype)

    in_itemsize = jnp.dtype(x.dtype).itemsize
    out_itemsize = out_dtype.itemsize
    sub = max(_sublane_multiple(x.dtype), _sublane_multiple(out_dtype))

    # --- VMEM cap: physical VMEM minus headroom (never the whole thing) ------
    phys_vmem = _physical_vmem_bytes()
    vmem_cap = max(16 << 20, min(phys_vmem * 3 // 4, phys_vmem - (16 << 20)))

    # Resident bytes per tile row: double-buffered input + output + ~2x f32 temps.
    bytes_per_row_resident = dim * (2 * in_itemsize + 2 * out_itemsize + 2 * 4)
    slack = (2 << 20) + 2 * dim * jnp.dtype(weight.dtype).itemsize

    # --- pick a bandwidth-friendly row tile ----------------------------------
    if block_rows is None:
        br = max(sub, target_tile_bytes // (dim * in_itemsize))
        br = max(sub, (br // sub) * sub)
        # Keep the grid >= min_grid_steps when rows allow, so v7x can shard the
        # 'parallel' axis across both TensorCores and the pipeline can overlap.
        br = min(br, max(sub, _round_up(pl.cdiv(rows, min_grid_steps), sub)))
    else:
        br = _round_up(int(block_rows), sub)
    br = min(br, _round_up(rows, sub))            # no point exceeding the data
    # If the footprint would exceed the VMEM cap, shrink the tile (not just the
    # reported limit).
    max_br_vmem = max(sub, ((vmem_cap - slack) // bytes_per_row_resident) // sub * sub)
    block_rows = int(max(sub, min(br, max_br_vmem)))

    vmem_bytes = int(min(vmem_cap,
                         max(block_rows * bytes_per_row_resident + slack, 16 << 20)))

    grid = (pl.cdiv(rows, block_rows),)           # ragged last tile handled by Pallas
    w2d = weight.reshape(1, dim)

    out = pl.pallas_call(
        functools.partial(_rmsnorm_kernel, eps=eps, fast_math=fast_math),
        out_shape=jax.ShapeDtypeStruct((rows, dim), out_dtype),
        grid_spec=pl.GridSpec(
            grid=grid,
            in_specs=[
                pl.BlockSpec((block_rows, dim), lambda i: (i, 0)),
                pl.BlockSpec((1, dim), lambda i: (0, 0)),   # weight stays resident
            ],
            out_specs=pl.BlockSpec((block_rows, dim), lambda i: (i, 0)),
        ),
        compiler_params=pltpu.CompilerParams(
            dimension_semantics=("parallel",),
            vmem_limit_bytes=vmem_bytes,
        ),
    )(x2d, w2d)

    return out.reshape(orig_shape[:-1] + (dim,))


def rmsnorm_ref(x, weight, eps=1e-6):
    x32 = x.astype(jnp.float32)
    inv = jax.lax.rsqrt(jnp.mean(x32 * x32, axis=-1, keepdims=True) + eps)
    normed = (x32 * inv).astype(x.dtype)
    return weight * normed


if __name__ == "__main__":
    # Case 1: small f32 case (dim lane-friendly, rows a multiple of 8).
    batch, seq, dim = 2, 8, 128
    x = jax.random.normal(jax.random.PRNGKey(0), (batch, seq, dim), dtype=jnp.float32)
    weight = jnp.ones((dim,), dtype=jnp.float32)   # nn.Parameter(torch.ones(dim))

    out = jax.block_until_ready(rmsnorm(x, weight, eps=1e-6))
    ref = rmsnorm_ref(x, weight, eps=1e-6)
    assert out.shape == x.shape and out.dtype == ref.dtype
    assert jnp.allclose(out, ref, atol=1e-5, rtol=1e-5)

    # Case 2: bf16 activations, odd row count (exercises the ragged last tile
    # with no host-side padding, plus dtype promotion to f32).
    b2, s2, d2 = 3, 5, 256
    x_bf16 = jax.random.normal(jax.random.PRNGKey(1), (b2, s2, d2), dtype=jnp.bfloat16)
    w2 = (1.0 + 0.01 * jax.random.normal(jax.random.PRNGKey(2), (d2,))).astype(jnp.float32)

    out2 = jax.block_until_ready(rmsnorm(x_bf16, w2, eps=1e-6))
    ref2 = rmsnorm_ref(x_bf16, w2, eps=1e-6)
    assert out2.shape == x_bf16.shape and out2.dtype == ref2.dtype  # f32 (promoted)
    assert jnp.allclose(out2, ref2, atol=1e-2, rtol=1e-2)

    # Case 3: f32, rows not a multiple of block_rows with a multi-step grid
    # (ragged last tile on a real pipeline).
    b3, s3, d3 = 5, 7, 128
    x3 = jax.random.normal(jax.random.PRNGKey(3), (b3, s3, d3), dtype=jnp.float32)
    w3 = (1.0 + 0.05 * jax.random.normal(jax.random.PRNGKey(4), (d3,))).astype(jnp.float32)
    out3 = jax.block_until_ready(rmsnorm(x3, w3, eps=1e-6))
    ref3 = rmsnorm_ref(x3, w3, eps=1e-6)
    assert out3.shape == x3.shape
    assert jnp.allclose(out3, ref3, atol=1e-5, rtol=1e-5)

    # Case 4: bandwidth-optimal path — bf16 output + fused fast-math body.
    out4 = jax.block_until_ready(
        rmsnorm(x_bf16, w2, eps=1e-6, out_dtype=jnp.bfloat16, fast_math=True))
    assert out4.shape == x_bf16.shape and out4.dtype == jnp.bfloat16
    assert jnp.allclose(out4.astype(jnp.float32),
                        ref2.astype(jnp.bfloat16).astype(jnp.float32),
                        atol=5e-2, rtol=5e-2)

    print("KERNEL_OK")
</pallas_src>

<mosaic_0001>
module attributes {stable_mosaic.version = 11 : i64} {
  func.func @_rmsnorm_kernel(%arg0: i32, %arg1: memref<8x128xf32, #tpu.memory_space<vmem>>, %arg2: memref<1x128xf32, #tpu.memory_space<vmem>>, %arg3: memref<8x128xf32, #tpu.memory_space<vmem>>) attributes {dimension_semantics = [#tpu.dimension_semantics<parallel>], iteration_bounds = array<i64: 2>, scalar_prefetch = 0 : i64, scratch_operands = 0 : i64, tpu.core_type = #tpu.core_type<tc>, window_params = [{transform_indices = @transform_0, window_bounds = array<i64: 8, 128>}, {pipeline_mode = #tpu.pipeline_mode<synchronous>, transform_indices = @transform_1, window_bounds = array<i64: 1, 128>}, {transform_indices = @transform_2, window_bounds = array<i64: 8, 128>}]} {
    %c0 = arith.constant 0 : index
    %c0_0 = arith.constant 0 : index
    %0 = vector.load %arg1[%c0, %c0_0] : memref<8x128xf32, #tpu.memory_space<vmem>>, vector<8x128xf32>
    %1 = arith.mulf %0, %0 : vector<8x128xf32>
    %cst = arith.constant dense<0.000000e+00> : vector<8xf32>
    %2 = vector.multi_reduction <add>, %1, %cst [1] : vector<8x128xf32> to vector<8xf32>
    %3 = vector.shape_cast %2 : vector<8xf32> to vector<8x1xf32>
    %cst_1 = arith.constant 1.280000e+02 : f32
    %4 = vector.broadcast %cst_1 : f32 to vector<8x1xf32>
    %5 = arith.divf %3, %4 : vector<8x1xf32>
    %cst_2 = arith.constant 9.99999997E-7 : f32
    %6 = vector.broadcast %cst_2 : f32 to vector<8x1xf32>
    %7 = arith.addf %5, %6 : vector<8x1xf32>
    %8 = math.rsqrt %7 : vector<8x1xf32>
    %c0_3 = arith.constant 0 : index
    %c0_4 = arith.constant 0 : index
    %9 = vector.load %arg2[%c0_3, %c0_4] : memref<1x128xf32, #tpu.memory_space<vmem>>, vector<1x128xf32>
    %10 = vector.broadcast %8 : vector<8x1xf32> to vector<8x128xf32>
    %11 = arith.mulf %0, %10 : vector<8x128xf32>
    %12 = vector.broadcast %9 : vector<1x128xf32> to vector<8x128xf32>
    %13 = arith.mulf %12, %11 : vector<8x128xf32>
    %c0_5 = arith.constant 0 : index
    %c0_6 = arith.constant 0 : index
    %14 = vector.load %arg3[%c0_5, %c0_6] : memref<8x128xf32, #tpu.memory_space<vmem>>, vector<8x128xf32>
    tpu.vector_store %arg3[%c0_5, %c0_6], %13 {strides = array<i32>} : memref<8x128xf32, #tpu.memory_space<vmem>>, vector<8x128xf32>,
    return
  }
  func.func @transform_0(%arg0: i32) -> (i32, i32) {
    %c0_i32 = arith.constant 0 : i32
    %c0_i32_0 = arith.constant 0 : i32
    return %arg0, %c0_i32 : i32, i32
  }
  func.func @transform_1(%arg0: i32) -> (i32, i32) {
    %c0_i32 = arith.constant 0 : i32
    %c0_i32_0 = arith.constant 0 : i32
    %c0_i32_1 = arith.constant 0 : i32
    return %c0_i32, %c0_i32_0 : i32, i32
  }
  func.func @transform_2(%arg0: i32) -> (i32, i32) {
    %c0_i32 = arith.constant 0 : i32
    %c0_i32_0 = arith.constant 0 : i32
    return %arg0, %c0_i32 : i32, i32
  }
}

</mosaic_0001>

<llo_original>
// kernel: tpu_custom_call.1
$region0: #{tpu_custom_call.1}
  #allocation0 [shape = 'u32[]', space=smem, size = 0x4, offset = 0x4, fixed_abs, tag = 'smem constant byte address 0x4 - core index']
  #allocation1 [shape = 'u32[144,128]{1,0:T(1,128)}', space=vmem, size = 0x12000, scoped, tag = 'internal scratch']
  %s0 = inlined_call_operand.hbm [shape: f32[16,128], index: 0, kind: input, shape index: {}]
  %s1 = inlined_call_operand.vmem [shape: f32[1,128], index: 1, kind: input, shape index: {}]
  %s2 = inlined_call_operand.hbm [shape: f32[16,128], index: 2, kind: output, shape index: {}]
  %s3 = sld [smem:[#allocation0]]
  $region45: #{tpu_custom_call.1} parent=0
    _
  %s5 = ssub.s32 1, %s3
  %s6 = scalar_select 0, %s5, %s3
  $region1: #{tpu_custom_call.1} parent=0
    #allocation2 [shape = 'u8[8192]{0}', space=vmem, size = 0x2000, scoped, tag = 'input window, operand 0']
    #allocation3 [shape = 's32[2]{0}', space=sflag, size = 0x8, scoped, tag = 'scoped memory for tpu_custom_call.1']
    #allocation4 [shape = 's32[2]{0}', space=sflag, size = 0x8, scoped, tag = 'scoped memory for tpu_custom_call.1']
    #allocation5 [shape = 'u8[8192]{0}', space=vmem, size = 0x2000, scoped, tag = 'output window, operand 0']
    %7 = vsyncpa [#allocation3], 0
    %s8 = scalar_lea.sflag [#allocation3], 1
    %9 = vsyncpa %s8, 0
    %10 = vsyncpa [#allocation4], 0
    %s11 = scalar_lea.sflag [#allocation4], 1
    %12 = vsyncpa %s11, 0
    loop: start=0, step=1, limit=4
    $region2: #{tpu_custom_call.1} parent=1 // loop_pre_header
      _
    $region3: #{tpu_custom_call.1} parent=1 // loop_header
      %s14 = sphi 0, %s18
      %p15 = scmp.ge.s32.totalorder %s14, 4
      %s24 = sphi 0, %s26
      %s27 = sphi 0, %s24
      %s28 = sphi 0, %s27
      %s44 = sphi 0, %s28
      %s48 = sphi 0, %s48
      %s50 = sphi 0, %s48
      %s51 = sphi 0, %s50
      %s65 = sphi 0, %s51
      %s71 = sphi 0, %s73
      %s74 = sphi 0, %s71
      %s75 = sphi 0, %s74
      %s91 = sphi 0, %s75
    $region4: #{tpu_custom_call.1} parent=1 // loop_header_branch
      %17 = sbr.rel (%p15) target = $region8
    $region5: #{tpu_custom_call.1} parent=1 // loop_body
      %s19 = ssub.s32 %s14, 1
      %s20 = ssub.s32 %s14, 2
      %s21 = sadd.s32 %s14, 1
      %s22 = ssub.s32 %s14, %s21
      %p23 = scmp.eq.s32.totalorder %s22, 0
      %s25 = sadd.s32 %s24, 1
      %s26 = scalar_select %p23, %s24, %s25
      %p29 = pneg %p23
      %p30 = scmp.eq.s32.totalorder %s14, 1
      %p31 = por %p29, %p30
      %p32 = scmp.ne.s32.totalorder %s24, %s27
      %p33 = scmp.eq.s32.totalorder %s14, 0
      %p34 = por %p32, %p33
      %p35 = scmp.ne.s32.totalorder %s24, %s27
      %p36 = scmp.eq.s32.totalorder %s19, 1
      %p37 = por %p35, %p36
      %p38 = scmp.ne.s32.totalorder %s27, %s28
      %p39 = scmp.eq.s32.totalorder %s19, 0
      %p40 = por %p38, %p39
      %p41 = scmp.ne.s32.totalorder %s27, %s28
      %p42 = scmp.eq.s32.totalorder %s20, 1
      %p43 = por %p41, %p42
      %p45 = scmp.ne.s32.totalorder %s28, %s44
      %p46 = scmp.eq.s32.totalorder %s20, 0
      %p47 = por %p45, %p46
      %s49 = sadd.s32 %s48, 1
      %p52 = scmp.eq.s32.totalorder %s14, 1
      %p53 = scmp.ne.s32.totalorder %s48, %s50
      %p54 = scmp.eq.s32.totalorder %s14, 0
      %p55 = por %p53, %p54
      %p56 = scmp.ne.s32.totalorder %s48, %s50
      %p57 = scmp.eq.s32.totalorder %s19, 1
      %p58 = por %p56, %p57
      %p59 = scmp.ne.s32.totalorder %s50, %s51
      %p60 = scmp.eq.s32.totalorder %s19, 0
      %p61 = por %p59, %p60
      %p62 = scmp.ne.s32.totalorder %s50, %s51
      %p63 = scmp.eq.s32.totalorder %s20, 1
      %p64 = por %p62, %p63
      %p66 = scmp.ne.s32.totalorder %s51, %s65
      %p67 = scmp.eq.s32.totalorder %s20, 0
      %p68 = por %p66, %p67
      %s69 = ssub.s32 %s14, %s21
      %p70 = scmp.eq.s32.totalorder %s69, 0
      %s72 = sadd.s32 %s71, 1
      %s73 = scalar_select %p70, %s71, %s72
      %p76 = pneg %p70
      %p77 = scmp.eq.s32.totalorder %s14, 1
      %p78 = por %p76, %p77
      %p79 = scmp.ne.s32.totalorder %s71, %s74
      %p80 = scmp.eq.s32.totalorder %s14, 0
      %p81 = por %p79, %p80
      %p82 = scmp.ne.s32.totalorder %s71, %s74
      %p83 = scmp.eq.s32.totalorder %s19, 1
      %p84 = por %p82, %p83
      %p85 = scmp.ne.s32.totalorder %s74, %s75
      %p86 = scmp.eq.s32.totalorder %s19, 0
      %p87 = por %p85, %p86
      %p88 = scmp.ne.s32.totalorder %s74, %s75
      %p89 = scmp.eq.s32.totalorder %s20, 1
      %p90 = por %p88, %p89
      %p92 = scmp.ne.s32.totalorder %s75, %s91
      %p93 = scmp.eq.s32.totalorder %s20, 0
      %p94 = por %p92, %p93
      %p95 = scmp.le.s32.totalorder 1, %s14
      %p96 = scmp.lt.s32.totalorder %s14, 3
      %p97 = pnand %p95, %p96
      %p98 = pneg %p97
      // Predicated region
      $region9: #{tpu_custom_call.1} parent=5 // pred_check
        _
      $region10: #{tpu_custom_call.1} parent=5 // pred_check_branch
        %100 = sbr.rel (%p97) target = $region12
      $region11: #{tpu_custom_call.1} parent=5 // pred_region
        %s101 = ssub.s32 %s14, 1
        // Predicated region
        $region13: #{tpu_custom_call.1} parent=11 // pred_check
          %p102 = pneg %p61
        $region14: #{tpu_custom_call.1} parent=11 // pred_check_branch
          %104 = sbr.rel (%p102) target = $region16
        $region15: #{tpu_custom_call.1} parent=11 // pred_region
          _
        $region16: #{tpu_custom_call.1} parent=11 // pred_fallthru
          _
      $region12: #{tpu_custom_call.1} parent=5 // pred_fallthru
        _
      %p105 = scmp.lt.s32.totalorder %s14, 2
      // Predicated region
      $region17: #{tpu_custom_call.1} parent=5 // pred_check
        %p106 = pneg %p105
      $region18: #{tpu_custom_call.1} parent=5 // pred_check_branch
        %108 = sbr.rel (%p106) target = $region20
      $region19: #{tpu_custom_call.1} parent=5 // pred_region
        // Predicated region
        $region21: #{tpu_custom_call.1} parent=19 // pred_check
          %p109 = pneg %p34
        $region22: #{tpu_custom_call.1} parent=19 // pred_check_branch
          %111 = sbr.rel (%p109) target = $region24
        $region23: #{tpu_custom_call.1} parent=19 // pred_region
          %s112 = sand.u32 %s24, 1
          %s113 = scalar_lea.sflag [#allocation3], %s112
          %s114 = sand.u32 %s24, 1
          %s115 = smul.addr %s114, 8
          %s116 = scalar_lea.vmem [#allocation2], %s115
          %s118 = ssub.s32 128, 128
          %119 = vsyncadd %s113, %s118
          %s120 = smul.addr %s14, 128
          %s121 = scalar_lea.hbm %s0, %s120
          %s123 = sshll.u32 %s116, 4
          %s124 = int_to_ptr.vmem [resolvable:$true] %s123
          %126 = dma.hbm_to_vmem [thread:$0]  %s121, 128, %s124, %s113
        $region24: #{tpu_custom_call.1} parent=19 // pred_fallthru
          _
      $region20: #{tpu_custom_call.1} parent=5 // pred_fallthru
        _
      %p127 = scmp.le.s32.totalorder 1, %s14
      %p128 = scmp.lt.s32.totalorder %s14, 3
      %p129 = pnand %p127, %p128
      %p130 = pneg %p129
      // Predicated region
      $region25: #{tpu_custom_call.1} parent=5 // pred_check
        _
      $region26: #{tpu_custom_call.1} parent=5 // pred_check_branch
        %132 = sbr.rel (%p129) target = $region28
      $region27: #{tpu_custom_call.1} parent=5 // pred_region
        %s133 = ssub.s32 %s14, 1
        %s134 = sand.u32 %s27, 1
        %s135 = scalar_lea.sflag [#allocation3], %s134
        %s136 = sand.u32 %s27, 1
        %s137 = smul.addr %s136, 8
        %s138 = scalar_lea.vmem [#allocation2], %s137
        // Predicated region
        $region29: #{tpu_custom_call.1} parent=27 // pred_check
          %p139 = pneg %p40
        $region30: #{tpu_custom_call.1} parent=27 // pred_check_branch
          %141 = sbr.rel (%p139) target = $region32
        $region31: #{tpu_custom_call.1} parent=27 // pred_region
          %142 = dma.done %s135, 128
        $region32: #{tpu_custom_call.1} parent=27 // pred_fallthru
          _
        %s143 = sand.u32 %s27, 1
        %s144 = scalar_lea.sflag [#allocation3], %s143
        %s145 = sand.u32 %s27, 1
        %s146 = smul.addr %s145, 8
        %s147 = scalar_lea.vmem [#allocation2], %s146
        %p148 = pneg %p40
        %p149 = pneg %p37
        %p150 = pneg %p61
        %p151 = pneg %p58
        %p152 = pneg %p87
        %p153 = pneg %p84
        %s154 = sand.u32 %s74, 1
        %s155 = scalar_lea.sflag [#allocation4], %s154
        %s156 = sand.u32 %s74, 1
        %s157 = smul.addr %s156, 8
        %s158 = scalar_lea.vmem [#allocation5], %s157
        %v159 = vld [vmem:[%s138] sm:$0xff]
        %v160 = vmul.f32 %v159, %v159
        %161 = vadd.xlane.f32.xlu0 %v160
        %v162 = vpop.xlane.xlu0 %161
        %v163 = vrcp.pop 128.0
        %v164 = vmul.f32 %v162, %v163
        %v165 = vadd.f32 %v164, 1e-06
        %v166 = vrsqrt.pop %v165
        %v167 = vld [vmem:[%s1] sm:$0x1]
        %v168 = vmul.f32 %v159, %v166
        %v170 = vlaneseq
        %v171 = vshrl.u32 %v170, 7
        %v172 = vsub.s32 0, %v171
        %v173 = vrot.slane %v167, %v172
        %v175 = vmul.f32 %v173, %v168
        %176 = vst [vmem:[%s158] sm:$0xff] %v175
        %s177 = sand.u32 %s74, 1
        %s178 = scalar_lea.sflag [#allocation4], %s177
        %s179 = sand.u32 %s74, 1
        %s180 = smul.addr %s179, 8
        %s181 = scalar_lea.vmem [#allocation5], %s180
        // Predicated region
        $region33: #{tpu_custom_call.1} parent=27 // pred_check
          %p182 = pneg %p84
        $region34: #{tpu_custom_call.1} parent=27 // pred_check_branch
          %184 = sbr.rel (%p182) target = $region36
        $region35: #{tpu_custom_call.1} parent=27 // pred_region
          %s186 = ssub.s32 128, 128
          %187 = vsyncadd %s178, %s186
          %s188 = smul.addr %s19, 128
          %s189 = scalar_lea.hbm %s2, %s188
          %s191 = sshll.u32 %s181, 4
          %s192 = int_to_ptr.vmem [resolvable:$true] %s191
          %194 = dma.vmem_to_hbm [thread:$0]  %s192, 128, %s189, %s178
        $region36: #{tpu_custom_call.1} parent=27 // pred_fallthru
          _
      $region28: #{tpu_custom_call.1} parent=5 // pred_fallthru
        _
      %p195 = scmp.le.s32.totalorder 2, %s14
      // Predicated region
      $region37: #{tpu_custom_call.1} parent=5 // pred_check
        %p196 = pneg %p195
      $region38: #{tpu_custom_call.1} parent=5 // pred_check_branch
        %198 = sbr.rel (%p196) target = $region40
      $region39: #{tpu_custom_call.1} parent=5 // pred_region
        %s199 = ssub.s32 %s14, 2
        // Predicated region
        $region41: #{tpu_custom_call.1} parent=39 // pred_check
          %p200 = pneg %p90
        $region42: #{tpu_custom_call.1} parent=39 // pred_check_branch
          %202 = sbr.rel (%p200) target = $region44
        $region43: #{tpu_custom_call.1} parent=39 // pred_region
          %s203 = sand.u32 %s75, 1
          %s204 = scalar_lea.sflag [#allocation4], %s203
          %s205 = sand.u32 %s75, 1
          %s206 = smul.addr %s205, 8
          %s207 = scalar_lea.vmem [#allocation5], %s206
          %208 = dma.done %s204, 128
        $region44: #{tpu_custom_call.1} parent=39 // pred_fallthru
          _
      $region40: #{tpu_custom_call.1} parent=5 // pred_fallthru
        _
    $region6: #{tpu_custom_call.1} parent=1 // loop_footer
      %s18 = sadd.s32 1, %s14
    $region7: #{tpu_custom_call.1} parent=1 // loop_footer_branch
      %13 = sbr.rel target = $region3
    $region8: #{tpu_custom_call.1} parent=1 // loop_exit
      _
    %209 = vsyncpa [#allocation3], 1
    %s210 = scalar_lea.sflag [#allocation3], 1
    %211 = vsyncpa %s210, 1
    %212 = vsyncpa [#allocation4], 1
    %s213 = scalar_lea.sflag [#allocation4], 1
    %214 = vsyncpa %s213, 1

</llo_original>
